<compile_context>
chip_gen: v6e
topology: v6e:2x2x1
jax: 0.10.0
libtpu: 0.0.40
codegen_flags: <defaults>
</compile_context>

<pallas_src>
import functools

import jax
import jax.numpy as jnp
from jax import lax
from jax.experimental import pallas as pl
from jax.experimental.pallas import tpu as pltpu


def regular_bottleneck_kernel(x_ref, bd1_ref, b1_ref, m_ref, b2_ref,
                              bd3_ref, b3_ref, o_ref, *, img_rows):
    # x_ref block: (1, rows, W*C) lane-dense; rows = batch_block * H.
    rows = x_ref.shape[1]

    # --- ext_conv1: 1x1 projection conv (BN scale folded into bd1) + shift + ReLU.
    t1 = jnp.dot(x_ref[0], bd1_ref[...], preferred_element_type=jnp.float32)
    t1 = jnp.maximum(t1 + b1_ref[...], 0.0)                  # (rows, W*Cint)

    # --- ext_conv2: 3x3 conv, stride 1, padding 1.
    # Horizontal taps + width zero-padding are folded into the block-tridiagonal
    # matrices (host prep).  Vertical taps: shift rows with pltpu.roll (XLU) and
    # zero the image-boundary rows with an iota mask (exact zero padding, also
    # correct across merged-batch image boundaries).  All three kernel rows are
    # then consumed by a single fused K = 3*W*Cint MXU dot.
    r = lax.broadcasted_iota(jnp.int32, t1.shape, 0) % img_rows
    t1_m1 = jnp.where(r != 0, pltpu.roll(t1, shift=1, axis=0), 0.0)          # t1[h-1]
    t1_p1 = jnp.where(r != img_rows - 1,
                      pltpu.roll(t1, shift=rows - 1, axis=0), 0.0)           # t1[h+1]
    lhs = jnp.concatenate([t1_m1, t1, t1_p1], axis=1)        # (rows, 3*W*Cint)
    t2 = jnp.dot(lhs, m_ref[...], preferred_element_type=jnp.float32)
    t2 = jnp.maximum(t2 + b2_ref[...], 0.0)                  # (rows, W*Cint)

    # --- ext_conv3: 1x1 expansion conv (BN folded) back to (rows, W*C) + ReLU.
    t3 = jnp.dot(t2, bd3_ref[...], preferred_element_type=jnp.float32)
    t3 = jnp.maximum(t3 + b3_ref[...], 0.0)                  # (rows, W*C)

    # --- ext_regul: Dropout2d(p=0) == identity.
    # --- residual add (re-read x from VMEM) + output ReLU; unmasked store.
    o_ref[0] = jnp.maximum(x_ref[0] + t3, 0.0).astype(o_ref.dtype)


def prepare_weights(w1, s1, b1, w2, s2, b2, w3, s3, b3, *, W):
    """Fold BN scales into the conv weights and expand them into the lane-dense
    block-(tri)diagonal matrices consumed by the kernel.  One-time host prep."""
    C, Cint = w1.shape
    w1f = (w1 * s1).astype(jnp.float32)              # (C, Cint)
    w2f = (w2 * s2).astype(jnp.float32)              # (3, 3, Cint, Cint) HWIO
    w3f = (w3 * s3).astype(jnp.float32)              # (Cint, C)

    eye = jnp.eye(W, dtype=jnp.float32)
    # 1x1 convs as block-diagonal matmuls acting on (rows, W*Cin) tiles.
    bd1 = jnp.einsum('uv,io->uivo', eye, w1f).reshape(W * C, W * Cint)
    bd3 = jnp.einsum('uv,io->uivo', eye, w3f).reshape(W * Cint, W * C)

    # 3x3 conv: one block-tridiagonal matrix per kernel row kh (kw taps + width
    # zero-padding live in the off-diagonal blocks), stacked vertically so the
    # three kernel rows are accumulated inside a single MXU dot.
    m_rows = []
    for kh in range(3):
        mk = jnp.zeros((W * Cint, W * Cint), jnp.float32)
        for kw in range(3):
            sel = jnp.eye(W, k=1 - kw, dtype=jnp.float32)     # w' = w + kw - 1
            mk = mk + jnp.einsum('uv,io->uivo', sel,
                                 w2f[kh, kw]).reshape(W * Cint, W * Cint)
        m_rows.append(mk)
    m = jnp.stack(m_rows, axis=0).reshape(3 * W * Cint, W * Cint)

    b1t = jnp.tile(b1.astype(jnp.float32), (1, W))   # (1, W*Cint)
    b2t = jnp.tile(b2.astype(jnp.float32), (1, W))   # (1, W*Cint)
    b3t = jnp.tile(b3.astype(jnp.float32), (1, W))   # (1, W*C)
    return bd1, b1t, m, b2t, bd3, b3t


def _pick_batch_block(N):
    """v5e/v6e have one TensorCore: merge the whole batch into one block so
    M per MXU dot is maximized and the grid is a single step.  v7x has two
    TensorCores: keep >= 2 'parallel' grid steps so both cores get work."""
    try:
        kind = jax.devices()[0].device_kind.lower()
    except Exception:
        kind = ""
    if "v7" in kind and N >= 2:
        return N // 2 if N % 2 == 0 else 1
    return N


def regular_bottleneck(x, bd1, b1t, m, b2t, bd3, b3t, *, batch_block=None):
    """x: (N, H, W, C) NHWC float32.  Returns (N, H, W, C)."""
    N, H, W, C = x.shape
    WC = W * C
    if batch_block is None:
        batch_block = _pick_batch_block(N)
    assert N % batch_block == 0
    G = N // batch_block
    rows = batch_block * H
    x2 = x.reshape(G, rows, WC)                      # contiguous -> free reshape

    def full_spec(shape):
        return pl.BlockSpec(shape, lambda g, nd=len(shape): (0,) * nd)

    kernel = functools.partial(regular_bottleneck_kernel, img_rows=H)

    out = pl.pallas_call(
        kernel,
        out_shape=jax.ShapeDtypeStruct((G, rows, WC), x.dtype),
        grid_spec=pltpu.PrefetchScalarGridSpec(
            num_scalar_prefetch=0,
            grid=(G,),
            in_specs=[
                pl.BlockSpec((1, rows, WC), lambda g: (g, 0, 0)),
                full_spec(bd1.shape), full_spec(b1t.shape),
                full_spec(m.shape), full_spec(b2t.shape),
                full_spec(bd3.shape), full_spec(b3t.shape),
            ],
            out_specs=pl.BlockSpec((1, rows, WC), lambda g: (g, 0, 0)),
        ),
        compiler_params=pltpu.CompilerParams(
            dimension_semantics=("parallel",)),
    )(x2, bd1, b1t, m, b2t, bd3, b3t)
    return out.reshape(N, H, W, C)


def reference_nhwc(x, w1, s1, b1, w2, s2, b2, w3, s3, b3):
    """Plain-JAX reference (conv_general_dilated) for correctness checking."""
    dn = ('NHWC', 'HWIO', 'NHWC')

    def conv(v, w, pad):
        return lax.conv_general_dilated(v, w, (1, 1), pad, dimension_numbers=dn)

    t1 = jnp.maximum(conv(x, w1.reshape(1, 1, *w1.shape), 'VALID') * s1 + b1, 0.0)
    t2 = jnp.maximum(conv(t1, w2, ((1, 1), (1, 1))) * s2 + b2, 0.0)
    t3 = jnp.maximum(conv(t2, w3.reshape(1, 1, *w3.shape), 'VALID') * s3 + b3, 0.0)
    return jnp.maximum(x + t3, 0.0)


def make_params(key, channels, internal_channels):
    ks = jax.random.split(key, 15)
    w1 = (0.1 * jax.random.normal(ks[0], (channels, internal_channels))).astype(jnp.float32)
    w2 = (0.1 * jax.random.normal(ks[1], (3, 3, internal_channels, internal_channels))).astype(jnp.float32)
    w3 = (0.1 * jax.random.normal(ks[2], (internal_channels, channels))).astype(jnp.float32)

    def bn_fold(kg, kb, km, kv, n):
        gamma = 1.0 + 0.1 * jax.random.normal(kg, (1, n))
        beta = 0.1 * jax.random.normal(kb, (1, n))
        rmean = 0.1 * jax.random.normal(km, (1, n))
        rvar = jax.random.uniform(kv, (1, n), minval=0.5, maxval=1.5)
        scale = gamma / jnp.sqrt(rvar + 1e-5)
        shift = beta - rmean * scale
        return scale.astype(jnp.float32), shift.astype(jnp.float32)

    s1, b1 = bn_fold(ks[3], ks[4], ks[5], ks[6], internal_channels)
    s2, b2 = bn_fold(ks[7], ks[8], ks[9], ks[10], internal_channels)
    s3, b3 = bn_fold(ks[11], ks[12], ks[13], ks[14], channels)
    return w1, s1, b1, w2, s2, b2, w3, s3, b3


if __name__ == "__main__":
    N, H, W = 2, 16, 16
    channels, internal_ratio = 32, 4
    internal_channels = channels // internal_ratio

    key = jax.random.PRNGKey(0)
    kx, kp = jax.random.split(key)
    x = jax.random.normal(kx, (N, H, W, channels), jnp.float32)   # NHWC
    raw = make_params(kp, channels, internal_channels)

    packed = prepare_weights(*raw, W=W)
    out = regular_bottleneck(x, *packed)
    out = jax.block_until_ready(out)

    ref = reference_nhwc(x, *raw)
    assert out.shape == ref.shape and out.dtype == ref.dtype
    err = float(jnp.max(jnp.abs(out - ref)))
    assert jnp.allclose(out, ref, atol=1e-3, rtol=1e-3), err

    print("KERNEL_OK")
</pallas_src>

<mosaic_0001>
module attributes {stable_mosaic.version = 11 : i64} {
  func.func @regular_bottleneck_kernel(%arg0: i32, %arg1: memref<1x32x512xf32, #tpu.memory_space<vmem>>, %arg2: memref<512x128xf32, #tpu.memory_space<vmem>>, %arg3: memref<1x128xf32, #tpu.memory_space<vmem>>, %arg4: memref<384x128xf32, #tpu.memory_space<vmem>>, %arg5: memref<1x128xf32, #tpu.memory_space<vmem>>, %arg6: memref<128x512xf32, #tpu.memory_space<vmem>>, %arg7: memref<1x512xf32, #tpu.memory_space<vmem>>, %arg8: memref<1x32x512xf32, #tpu.memory_space<vmem>>) attributes {dimension_semantics = [#tpu.dimension_semantics<parallel>], iteration_bounds = array<i64: 1>, scalar_prefetch = 0 : i64, scratch_operands = 0 : i64, tpu.core_type = #tpu.core_type<tc>, window_params = [{transform_indices = @transform_0, window_bounds = array<i64: 1, 32, 512>}, {pipeline_mode = #tpu.pipeline_mode<synchronous>, transform_indices = @transform_1, window_bounds = array<i64: 512, 128>}, {pipeline_mode = #tpu.pipeline_mode<synchronous>, transform_indices = @transform_2, window_bounds = array<i64: 1, 128>}, {pipeline_mode = #tpu.pipeline_mode<synchronous>, transform_indices = @transform_3, window_bounds = array<i64: 384, 128>}, {pipeline_mode = #tpu.pipeline_mode<synchronous>, transform_indices = @transform_4, window_bounds = array<i64: 1, 128>}, {pipeline_mode = #tpu.pipeline_mode<synchronous>, transform_indices = @transform_5, window_bounds = array<i64: 128, 512>}, {pipeline_mode = #tpu.pipeline_mode<synchronous>, transform_indices = @transform_6, window_bounds = array<i64: 1, 512>}, {transform_indices = @transform_7, window_bounds = array<i64: 1, 32, 512>}]} {
    %c0 = arith.constant 0 : index
    %c0_0 = arith.constant 0 : index
    %c0_1 = arith.constant 0 : index
    %0 = vector.load %arg1[%c0, %c0_0, %c0_1] : memref<1x32x512xf32, #tpu.memory_space<vmem>>, vector<1x32x512xf32>
    %1 = vector.shape_cast %0 : vector<1x32x512xf32> to vector<32x512xf32>
    %c0_2 = arith.constant 0 : index
    %c0_3 = arith.constant 0 : index
    %2 = vector.load %arg2[%c0_2, %c0_3] : memref<512x128xf32, #tpu.memory_space<vmem>>, vector<512x128xf32>
    %cst = arith.constant dense<0.000000e+00> : vector<32x128xf32>
    %3 = tpu.matmul %1, %2, %cst {dimension_numbers = #tpu.dot_dimension_numbers<[1], [0], [0], [1], [0, 0, 1, 1], [], []>} : vector<32x512xf32>, vector<512x128xf32>, vector<32x128xf32> -> vector<32x128xf32>
    %c0_4 = arith.constant 0 : index
    %c0_5 = arith.constant 0 : index
    %4 = vector.load %arg3[%c0_4, %c0_5] : memref<1x128xf32, #tpu.memory_space<vmem>>, vector<1x128xf32>
    %5 = vector.broadcast %4 : vector<1x128xf32> to vector<32x128xf32>
    %6 = arith.addf %3, %5 : vector<32x128xf32>
    %cst_6 = arith.constant 0.000000e+00 : f32
    %7 = vector.broadcast %cst_6 : f32 to vector<32x128xf32>
    %8 = arith.maximumf %6, %7 : vector<32x128xf32>
    %9 = tpu.iota {dimensions = array<i32: 0>} : vector<32x128xi32>
    %c16_i32 = arith.constant 16 : i32
    %c0_i32 = arith.constant 0 : i32
    %10 = arith.cmpi eq, %c16_i32, %c0_i32 : i32
    %c1_i32 = arith.constant 1 : i32
    %11 = arith.select %10, %c1_i32, %c16_i32 : i32
    %12 = vector.broadcast %11 : i32 to vector<32x128xi32>
    %13 = arith.remsi %9, %12 : vector<32x128xi32>
    %c0_i32_7 = arith.constant 0 : i32
    %14 = vector.broadcast %c0_i32_7 : i32 to vector<32x128xi32>
    %15 = arith.cmpi ne, %13, %14 : vector<32x128xi32>
    %c0_i32_8 = arith.constant 0 : i32
    %16 = vector.broadcast %c0_i32_8 : i32 to vector<32x128xi32>
    %17 = arith.cmpi slt, %13, %16 : vector<32x128xi32>
    %c0_i32_9 = arith.constant 0 : i32
    %18 = arith.cmpi slt, %11, %c0_i32_9 : i32
    %19 = vector.broadcast %18 : i1 to vector<32x128xi1>
    %20 = vector.broadcast %19 : vector<32x128xi1> to vector<32x128xi1>
    %21 = arith.xori %17, %20 : vector<32x128xi1>
    %22 = arith.andi %21, %15 : vector<32x128xi1>
    %23 = vector.broadcast %11 : i32 to vector<32x128xi32>
    %24 = arith.addi %13, %23 : vector<32x128xi32>
    %25 = arith.select %22, %24, %13 : vector<32x128xi1>, vector<32x128xi32>
    %c0_i32_10 = arith.constant 0 : i32
    %26 = vector.broadcast %c0_i32_10 : i32 to vector<32x128xi32>
    %27 = arith.cmpi ne, %25, %26 : vector<32x128xi32>
    %c1_i32_11 = arith.constant 1 : i32
    %28 = tpu.dynamic_rotate %8 by %c1_i32_11 dim 0 : vector<32x128xf32>, i32 -> vector<32x128xf32>
    %cst_12 = arith.constant 0.000000e+00 : f32
    %29 = vector.broadcast %cst_12 : f32 to vector<32x128xf32>
    %30 = arith.select %27, %28, %29 : vector<32x128xi1>, vector<32x128xf32>
    %c15_i32 = arith.constant 15 : i32
    %31 = vector.broadcast %c15_i32 : i32 to vector<32x128xi32>
    %32 = arith.cmpi ne, %25, %31 : vector<32x128xi32>
    %c31_i32 = arith.constant 31 : i32
    %33 = tpu.dynamic_rotate %8 by %c31_i32 dim 0 : vector<32x128xf32>, i32 -> vector<32x128xf32>
    %cst_13 = arith.constant 0.000000e+00 : f32
    %34 = vector.broadcast %cst_13 : f32 to vector<32x128xf32>
    %35 = arith.select %32, %33, %34 : vector<32x128xi1>, vector<32x128xf32>
    %36 = tpu.concatenate %30, %8, %35 in 1 : vector<32x128xf32>, vector<32x128xf32>, vector<32x128xf32> -> vector<32x384xf32>
    %c0_14 = arith.constant 0 : index
    %c0_15 = arith.constant 0 : index
    %37 = vector.load %arg4[%c0_14, %c0_15] : memref<384x128xf32, #tpu.memory_space<vmem>>, vector<384x128xf32>
    %cst_16 = arith.constant dense<0.000000e+00> : vector<32x128xf32>
    %38 = tpu.matmul %36, %37, %cst_16 {dimension_numbers = #tpu.dot_dimension_numbers<[1], [0], [0], [1], [0, 0, 1, 1], [], []>} : vector<32x384xf32>, vector<384x128xf32>, vector<32x128xf32> -> vector<32x128xf32>
    %c0_17 = arith.constant 0 : index
    %c0_18 = arith.constant 0 : index
    %39 = vector.load %arg5[%c0_17, %c0_18] : memref<1x128xf32, #tpu.memory_space<vmem>>, vector<1x128xf32>
    %40 = vector.broadcast %39 : vector<1x128xf32> to vector<32x128xf32>
    %41 = arith.addf %38, %40 : vector<32x128xf32>
    %cst_19 = arith.constant 0.000000e+00 : f32
    %42 = vector.broadcast %cst_19 : f32 to vector<32x128xf32>
    %43 = arith.maximumf %41, %42 : vector<32x128xf32>
    %c0_20 = arith.constant 0 : index
    %c0_21 = arith.constant 0 : index
    %44 = vector.load %arg6[%c0_20, %c0_21] : memref<128x512xf32, #tpu.memory_space<vmem>>, vector<128x512xf32>
    %cst_22 = arith.constant dense<0.000000e+00> : vector<32x512xf32>
    %45 = tpu.matmul %43, %44, %cst_22 {dimension_numbers = #tpu.dot_dimension_numbers<[1], [0], [0], [1], [0, 0, 1, 1], [], []>} : vector<32x128xf32>, vector<128x512xf32>, vector<32x512xf32> -> vector<32x512xf32>
    %c0_23 = arith.constant 0 : index
    %c0_24 = arith.constant 0 : index
    %46 = vector.load %arg7[%c0_23, %c0_24] : memref<1x512xf32, #tpu.memory_space<vmem>>, vector<1x512xf32>
    %47 = vector.broadcast %46 : vector<1x512xf32> to vector<32x512xf32>
    %48 = arith.addf %45, %47 : vector<32x512xf32>
    %cst_25 = arith.constant 0.000000e+00 : f32
    %49 = vector.broadcast %cst_25 : f32 to vector<32x512xf32>
    %50 = arith.maximumf %48, %49 : vector<32x512xf32>
    %c0_26 = arith.constant 0 : index
    %c0_27 = arith.constant 0 : index
    %c0_28 = arith.constant 0 : index
    %51 = vector.load %arg1[%c0_26, %c0_27, %c0_28] : memref<1x32x512xf32, #tpu.memory_space<vmem>>, vector<1x32x512xf32>
    %52 = vector.shape_cast %51 : vector<1x32x512xf32> to vector<32x512xf32>
    %53 = arith.addf %52, %50 : vector<32x512xf32>
    %cst_29 = arith.constant 0.000000e+00 : f32
    %54 = vector.broadcast %cst_29 : f32 to vector<32x512xf32>
    %55 = arith.maximumf %53, %54 : vector<32x512xf32>
    %c0_30 = arith.constant 0 : index
    %c0_31 = arith.constant 0 : index
    %c0_32 = arith.constant 0 : index
    %56 = vector.load %arg8[%c0_30, %c0_31, %c0_32] : memref<1x32x512xf32, #tpu.memory_space<vmem>>, vector<1x32x512xf32>
    %57 = vector.shape_cast %56 : vector<1x32x512xf32> to vector<32x512xf32>
    %58 = vector.shape_cast %55 : vector<32x512xf32> to vector<1x32x512xf32>
    tpu.vector_store %arg8[%c0_30, %c0_31, %c0_32], %58 {strides = array<i32>} : memref<1x32x512xf32, #tpu.memory_space<vmem>>, vector<1x32x512xf32>,
    return
  }
  func.func @transform_0(%arg0: i32) -> (i32, i32, i32) {
    %c0_i32 = arith.constant 0 : i32
    %c0_i32_0 = arith.constant 0 : i32
    %c0_i32_1 = arith.constant 0 : i32
    return %arg0, %c0_i32, %c0_i32_0 : i32, i32, i32
  }
  func.func @transform_1(%arg0: i32) -> (i32, i32) {
    %c0_i32 = arith.constant 0 : i32
    %c0_i32_0 = arith.constant 0 : i32
    %c0_i32_1 = arith.constant 0 : i32
    return %c0_i32, %c0_i32_0 : i32, i32
  }
  func.func @transform_2(%arg0: i32) -> (i32, i32) {
    %c0_i32 = arith.constant 0 : i32
    %c0_i32_0 = arith.constant 0 : i32
    %c0_i32_1 = arith.constant 0 : i32
    return %c0_i32, %c0_i32_0 : i32, i32
  }
  func.func @transform_3(%arg0: i32) -> (i32, i32) {
    %c0_i32 = arith.constant 0 : i32
    %c0_i32_0 = arith.constant 0 : i32
    %c0_i32_1 = arith.constant 0 : i32
    return %c0_i32, %c0_i32_0 : i32, i32
  }
  func.func @transform_4(%arg0: i32) -> (i32, i32) {
    %c0_i32 = arith.constant 0 : i32
    %c0_i32_0 = arith.constant 0 : i32
    %c0_i32_1 = arith.constant 0 : i32
    return %c0_i32, %c0_i32_0 : i32, i32
  }
  func.func @transform_5(%arg0: i32) -> (i32, i32) {
    %c0_i32 = arith.constant 0 : i32
    %c0_i32_0 = arith.constant 0 : i32
    %c0_i32_1 = arith.constant 0 : i32
    return %c0_i32, %c0_i32_0 : i32, i32
  }
  func.func @transform_6(%arg0: i32) -> (i32, i32) {
    %c0_i32 = arith.constant 0 : i32
    %c0_i32_0 = arith.constant 0 : i32
    %c0_i32_1 = arith.constant 0 : i32
    return %c0_i32, %c0_i32_0 : i32, i32
  }
  func.func @transform_7(%arg0: i32) -> (i32, i32, i32) {
    %c0_i32 = arith.constant 0 : i32
    %c0_i32_0 = arith.constant 0 : i32
    %c0_i32_1 = arith.constant 0 : i32
    return %arg0, %c0_i32, %c0_i32_0 : i32, i32, i32
  }
}

</mosaic_0001>

<llo_original>
// kernel: tpu_custom_call.1
$region0: #{tpu_custom_call.1}
  #allocation0 [shape = 'u32[]', space=smem, size = 0x4, offset = 0x4, fixed_abs, tag = 'smem constant byte address 0x4 - core index']
  #allocation1 [shape = 'u32[144,128]{1,0:T(1,128)}', space=vmem, size = 0x12000, scoped, tag = 'internal scratch']
  %s0 = inlined_call_operand.hbm [shape: f32[1,32,512], index: 0, kind: input, shape index: {}]
  %s1 = inlined_call_operand.hbm [shape: f32[512,128], index: 1, kind: input, shape index: {}]
  %s2 = inlined_call_operand.vmem [shape: f32[1,128], index: 2, kind: input, shape index: {}]
  %s3 = inlined_call_operand.hbm [shape: f32[384,128], index: 3, kind: input, shape index: {}]
  %s4 = inlined_call_operand.vmem [shape: f32[1,128], index: 4, kind: input, shape index: {}]
  %s5 = inlined_call_operand.hbm [shape: f32[128,512], index: 5, kind: input, shape index: {}]
  %s6 = inlined_call_operand.vmem [shape: f32[1,512], index: 6, kind: input, shape index: {}]
  %s7 = inlined_call_operand.hbm [shape: f32[1,32,512], index: 7, kind: output, shape index: {}]
  %s8 = sld [smem:[#allocation0]]
  $region54: #{tpu_custom_call.1} parent=0
    _
  %s10 = ssub.s32 1, %s8
  %s11 = scalar_select 0, %s10, %s8
  $region1: #{tpu_custom_call.1} parent=0
    #allocation2 [shape = 'u8[65536]{0}', space=vmem, size = 0x10000, scoped, tag = 'input window, operand 0, single buffered']
    #allocation3 [shape = 's32[1]{0}', space=sflag, size = 0x4, scoped, tag = 'scoped memory for tpu_custom_call.1']
    #allocation4 [shape = 's32[1]{0}', space=sflag, size = 0x4, scoped, tag = 'scoped memory for tpu_custom_call.1']
    #allocation5 [shape = 'u8[262144]{0}', space=vmem, size = 0x40000, scoped, tag = 'input window, operand 1, single buffered']
    #allocation6 [shape = 's32[1]{0}', space=sflag, size = 0x4, scoped, tag = 'scoped memory for tpu_custom_call.1']
    #allocation7 [shape = 'u8[196608]{0}', space=vmem, size = 0x30000, scoped, tag = 'input window, operand 3, single buffered']
    #allocation8 [shape = 'u8[262144]{0}', space=vmem, size = 0x40000, scoped, tag = 'input window, operand 5, single buffered']
    #allocation9 [shape = 's32[1]{0}', space=sflag, size = 0x4, scoped, tag = 'scoped memory for tpu_custom_call.1']
    #allocation10 [shape = 'u8[65536]{0}', space=vmem, size = 0x10000, scoped, tag = 'output window, operand 0, single buffered']
    %12 = vsyncpa [#allocation3], 0
    %13 = vsyncpa [#allocation6], 0
    %14 = vsyncpa [#allocation9], 0
    %15 = vsyncpa [#allocation4], 0
    // Predicated region
    $region2: #{tpu_custom_call.1} parent=1 // pred_check
      _
    $region3: #{tpu_custom_call.1} parent=1 // pred_check_branch
      %17 = sbr.rel (0) target = $region5
    $region4: #{tpu_custom_call.1} parent=1 // pred_region
      %s19 = ssub.s32 2048, 2048
      %20 = vsyncadd [#allocation3], %s19
      %s21 = sshll.u32 [#allocation2], 4
      %s22 = int_to_ptr.vmem [resolvable:$true] %s21
      %27 = dma.hbm_to_vmem [thread:$0]  %s0, 2048, %s22, [#allocation3], 512, 512, 32
    $region5: #{tpu_custom_call.1} parent=1 // pred_fallthru
      _
    // Predicated region
    $region6: #{tpu_custom_call.1} parent=1 // pred_check
      _
    $region7: #{tpu_custom_call.1} parent=1 // pred_check_branch
      %29 = sbr.rel (0) target = $region9
    $region8: #{tpu_custom_call.1} parent=1 // pred_region
      %s31 = ssub.s32 8192, 8192
      %32 = vsyncadd [#allocation6], %s31
      %s33 = sshll.u32 [#allocation5], 4
      %s34 = int_to_ptr.vmem [resolvable:$true] %s33
      %39 = dma.hbm_to_vmem [thread:$0]  %s1, 8192, %s34, [#allocation6], 128, 128, 8
    $region9: #{tpu_custom_call.1} parent=1 // pred_fallthru
      _
    // Predicated region
    $region10: #{tpu_custom_call.1} parent=1 // pred_check
      _
    $region11: #{tpu_custom_call.1} parent=1 // pred_check_branch
      %41 = sbr.rel (0) target = $region13
    $region12: #{tpu_custom_call.1} parent=1 // pred_region
      _
    $region13: #{tpu_custom_call.1} parent=1 // pred_fallthru
      _
    // Predicated region
    $region14: #{tpu_custom_call.1} parent=1 // pred_check
      _
    $region15: #{tpu_custom_call.1} parent=1 // pred_check_branch
      %43 = sbr.rel (0) target = $region17
    $region16: #{tpu_custom_call.1} parent=1 // pred_region
      %s45 = ssub.s32 6144, 6144
      %46 = vsyncadd [#allocation6], %s45
      %s47 = sshll.u32 [#allocation7], 4
      %s48 = int_to_ptr.vmem [resolvable:$true] %s47
      %53 = dma.hbm_to_vmem [thread:$0]  %s3, 6144, %s48, [#allocation6], 128, 128, 8
    $region17: #{tpu_custom_call.1} parent=1 // pred_fallthru
      _
    // Predicated region
    $region18: #{tpu_custom_call.1} parent=1 // pred_check
      _
    $region19: #{tpu_custom_call.1} parent=1 // pred_check_branch
      %55 = sbr.rel (0) target = $region21
    $region20: #{tpu_custom_call.1} parent=1 // pred_region
      _
    $region21: #{tpu_custom_call.1} parent=1 // pred_fallthru
      _
    // Predicated region
    $region22: #{tpu_custom_call.1} parent=1 // pred_check
      _
    $region23: #{tpu_custom_call.1} parent=1 // pred_check_branch
      %57 = sbr.rel (0) target = $region25
    $region24: #{tpu_custom_call.1} parent=1 // pred_region
      %s59 = ssub.s32 8192, 8192
      %60 = vsyncadd [#allocation9], %s59
      %s61 = sshll.u32 [#allocation8], 4
      %s62 = int_to_ptr.vmem [resolvable:$true] %s61
      %67 = dma.hbm_to_vmem [thread:$0]  %s5, 8192, %s62, [#allocation9], 512, 512, 32
    $region25: #{tpu_custom_call.1} parent=1 // pred_fallthru
      _
    // Predicated region
    $region26: #{tpu_custom_call.1} parent=1 // pred_check
      _
    $region27: #{tpu_custom_call.1} parent=1 // pred_check_branch
      %69 = sbr.rel (0) target = $region29
    $region28: #{tpu_custom_call.1} parent=1 // pred_region
      _
    $region29: #{tpu_custom_call.1} parent=1 // pred_fallthru
      _
    // Predicated region
    $region30: #{tpu_custom_call.1} parent=1 // pred_check
      _
    $region31: #{tpu_custom_call.1} parent=1 // pred_check_branch
      %71 = sbr.rel (0) target = $region33
    $region32: #{tpu_custom_call.1} parent=1 // pred_region
      %72 = dma.done [#allocation3], 2048
    $region33: #{tpu_custom_call.1} parent=1 // pred_fallthru
      _
    // Predicated region
    $region34: #{tpu_custom_call.1} parent=1 // pred_check
      _
    $region35: #{tpu_custom_call.1} parent=1 // pred_check_branch
      %74 = sbr.rel (0) target = $region37
    $region36: #{tpu_custom_call.1} parent=1 // pred_region
      %75 = dma.done [#allocation6], 8192
    $region37: #{tpu_custom_call.1} parent=1 // pred_fallthru
      _
    // Predicated region
    $region38: #{tpu_custom_call.1} parent=1 // pred_check
      _
    $region39: #{tpu_custom_call.1} parent=1 // pred_check_branch
      %77 = sbr.rel (0) target = $region41
    $region40: #{tpu_custom_call.1} parent=1 // pred_region
      %78 = dma.done [#allocation6], 6144
    $region41: #{tpu_custom_call.1} parent=1 // pred_fallthru
      _
    // Predicated region
    $region42: #{tpu_custom_call.1} parent=1 // pred_check
      _
    $region43: #{tpu_custom_call.1} parent=1 // pred_check_branch
      %80 = sbr.rel (0) target = $region45
    $region44: #{tpu_custom_call.1} parent=1 // pred_region
      %81 = dma.done [#allocation9], 8192
    $region45: #{tpu_custom_call.1} parent=1 // pred_fallthru
      _
    %v82 = vld [vmem:[#allocation2] sm:$0xff]
    %v83 = vld [vmem:[#allocation2 + $0x8] sm:$0xff]
    %v84 = vld [vmem:[#allocation2 + $0x10] sm:$0xff]
    %v85 = vld [vmem:[#allocation2 + $0x18] sm:$0xff]
    %v86 = vld [vmem:[#allocation2 + $0x20] sm:$0xff]
    %v87 = vld [vmem:[#allocation2 + $0x28] sm:$0xff]
    %v88 = vld [vmem:[#allocation2 + $0x30] sm:$0xff]
    %v89 = vld [vmem:[#allocation2 + $0x38] sm:$0xff]
    %v90 = vld [vmem:[#allocation2 + $0x40] sm:$0xff]
    %v91 = vld [vmem:[#allocation2 + $0x48] sm:$0xff]
    %v92 = vld [vmem:[#allocation2 + $0x50] sm:$0xff]
    %v93 = vld [vmem:[#allocation2 + $0x58] sm:$0xff]
    %v94 = vld [vmem:[#allocation2 + $0x60] sm:$0xff]
    %v95 = vld [vmem:[#allocation2 + $0x68] sm:$0xff]
    %v96 = vld [vmem:[#allocation2 + $0x70] sm:$0xff]
    %v97 = vld [vmem:[#allocation2 + $0x78] sm:$0xff]
    %v98 = vld [vmem:[#allocation5] sm:$0xff]
    %v99 = vld [vmem:[#allocation5 + $0x8] sm:$0xff]
    %v100 = vld [vmem:[#allocation5 + $0x10] sm:$0xff]
    %v101 = vld [vmem:[#allocation5 + $0x18] sm:$0xff]
    %v102 = vld [vmem:[#allocation5 + $0x20] sm:$0xff]
    %v103 = vld [vmem:[#allocation5 + $0x28] sm:$0xff]
    %v104 = vld [vmem:[#allocation5 + $0x30] sm:$0xff]
    %v105 = vld [vmem:[#allocation5 + $0x38] sm:$0xff]
    %v106 = vld [vmem:[#allocation5 + $0x40] sm:$0xff]
    %v107 = vld [vmem:[#allocation5 + $0x48] sm:$0xff]
    %v108 = vld [vmem:[#allocation5 + $0x50] sm:$0xff]
    %v109 = vld [vmem:[#allocation5 + $0x58] sm:$0xff]
    %v110 = vld [vmem:[#allocation5 + $0x60] sm:$0xff]
    %v111 = vld [vmem:[#allocation5 + $0x68] sm:$0xff]
    %v112 = vld [vmem:[#allocation5 + $0x70] sm:$0xff]
    %v113 = vld [vmem:[#allocation5 + $0x78] sm:$0xff]
    %v114 = vld [vmem:[#allocation5 + $0x80] sm:$0xff]
    %v115 = vld [vmem:[#allocation5 + $0x88] sm:$0xff]
    %v116 = vld [vmem:[#allocation5 + $0x90] sm:$0xff]
    %v117 = vld [vmem:[#allocation5 + $0x98] sm:$0xff]
    %v118 = vld [vmem:[#allocation5 + $0xa0] sm:$0xff]
    %v119 = vld [vmem:[#allocation5 + $0xa8] sm:$0xff]
    %v120 = vld [vmem:[#allocation5 + $0xb0] sm:$0xff]
    %v121 = vld [vmem:[#allocation5 + $0xb8] sm:$0xff]
    %v122 = vld [vmem:[#allocation5 + $0xc0] sm:$0xff]
    %v123 = vld [vmem:[#allocation5 + $0xc8] sm:$0xff]
    %v124 = vld [vmem:[#allocation5 + $0xd0] sm:$0xff]
    %v125 = vld [vmem:[#allocation5 + $0xd8] sm:$0xff]
    %v126 = vld [vmem:[#allocation5 + $0xe0] sm:$0xff]
    %v127 = vld [vmem:[#allocation5 + $0xe8] sm:$0xff]
    %v128 = vld [vmem:[#allocation5 + $0xf0] sm:$0xff]
    %v129 = vld [vmem:[#allocation5 + $0xf8] sm:$0xff]
    %v130 = vld [vmem:[#allocation5 + $0x100] sm:$0xff]
    %v131 = vld [vmem:[#allocation5 + $0x108] sm:$0xff]
    %v132 = vld [vmem:[#allocation5 + $0x110] sm:$0xff]
    %v133 = vld [vmem:[#allocation5 + $0x118] sm:$0xff]
    %v134 = vld [vmem:[#allocation5 + $0x120] sm:$0xff]
    %v135 = vld [vmem:[#allocation5 + $0x128] sm:$0xff]
    %v136 = vld [vmem:[#allocation5 + $0x130] sm:$0xff]
    %v137 = vld [vmem:[#allocation5 + $0x138] sm:$0xff]
    %v138 = vld [vmem:[#allocation5 + $0x140] sm:$0xff]
    %v139 = vld [vmem:[#allocation5 + $0x148] sm:$0xff]
    %v140 = vld [vmem:[#allocation5 + $0x150] sm:$0xff]
    %v141 = vld [vmem:[#allocation5 + $0x158] sm:$0xff]
    %v142 = vld [vmem:[#allocation5 + $0x160] sm:$0xff]
    %v143 = vld [vmem:[#allocation5 + $0x168] sm:$0xff]
    %v144 = vld [vmem:[#allocation5 + $0x170] sm:$0xff]
    %v145 = vld [vmem:[#allocation5 + $0x178] sm:$0xff]
    %v146 = vld [vmem:[#allocation5 + $0x180] sm:$0xff]
    %v147 = vld [vmem:[#allocation5 + $0x188] sm:$0xff]
    %v148 = vld [vmem:[#allocation5 + $0x190] sm:$0xff]
    %v149 = vld [vmem:[#allocation5 + $0x198] sm:$0xff]
    %v150 = vld [vmem:[#allocation5 + $0x1a0] sm:$0xff]
    %v151 = vld [vmem:[#allocation5 + $0x1a8] sm:$0xff]
    %v152 = vld [vmem:[#allocation5 + $0x1b0] sm:$0xff]
    %v153 = vld [vmem:[#allocation5 + $0x1b8] sm:$0xff]
    %v154 = vld [vmem:[#allocation5 + $0x1c0] sm:$0xff]
    %v155 = vld [vmem:[#allocation5 + $0x1c8] sm:$0xff]
    %v156 = vld [vmem:[#allocation5 + $0x1d0] sm:$0xff]
    %v157 = vld [vmem:[#allocation5 + $0x1d8] sm:$0xff]
    %v158 = vld [vmem:[#allocation5 + $0x1e0] sm:$0xff]
    %v159 = vld [vmem:[#allocation5 + $0x1e8] sm:$0xff]
    %v160 = vld [vmem:[#allocation5 + $0x1f0] sm:$0xff]
    %v161 = vld [vmem:[#allocation5 + $0x1f8] sm:$0xff]
    %v162 = vld [vmem:[%s2] sm:$0x1]
    %v164 = vlaneseq
    %v165 = vshrl.u32 %v164, 7
    %v166 = vsub.s32 0, %v165
    %v167 = vrot.slane %v162, %v166
    %169 = vmatprep.subr.mxu0 0.0
    %170 = vmatpush1.msra.mxu0 %v113
    %171 = vmatprep.subr.mxu0 0.0
    %172 = vmatpush1.msra.mxu0 %v112
    %173 = vmatprep.subr.mxu0 0.0
    %174 = vmatpush1.msra.mxu0 %v111
    %175 = vmatprep.subr.mxu0 0.0
    %176 = vmatpush1.msra.mxu0 %v110
    %177 = vmatprep.subr.mxu0 0.0
    %178 = vmatpush1.msra.mxu0 %v109
    %179 = vmatprep.subr.mxu0 0.0
    %180 = vmatpush1.msra.mxu0 %v108
    %181 = vmatprep.subr.mxu0 0.0
    %182 = vmatpush1.msra.mxu0 %v107
    %183 = vmatprep.subr.mxu0 0.0
    %184 = vmatpush1.msra.mxu0 %v106
    %185 = vmatprep.subr.mxu0 0.0
    %186 = vmatpush1.msra.mxu0 %v105
    %187 = vmatprep.subr.mxu0 0.0
    %188 = vmatpush1.msra.mxu0 %v104
    %189 = vmatprep.subr.mxu0 0.0
    %190 = vmatpush1.msra.mxu0 %v103
    %191 = vmatprep.subr.mxu0 0.0
    %192 = vmatpush1.msra.mxu0 %v102
    %193 = vmatprep.subr.mxu0 0.0
    %194 = vmatpush1.msra.mxu0 %v101
    %195 = vmatprep.subr.mxu0 0.0
    %196 = vmatpush1.msra.mxu0 %v100
    %197 = vmatprep.subr.mxu0 0.0
    %198 = vmatpush1.msra.mxu0 %v99
    %199 = vmatprep.subr.mxu0 0.0
    %200 = vmatpush1.msra.mxu0 %v98
    %201 = vmatprep.subr.mxu0 0.0
    %202 = vmatpush2.msra.mxu0 %v129
    %203 = vmatprep.subr.mxu0 0.0
    %204 = vmatpush2.msra.mxu0 %v128
    %205 = vmatprep.subr.mxu0 0.0
    %206 = vmatpush2.msra.mxu0 %v127
    %207 = vmatprep.subr.mxu0 0.0
    %208 = vmatpush2.msra.mxu0 %v126
    %209 = vmatprep.subr.mxu0 0.0
    %210 = vmatpush2.msra.mxu0 %v125
    %211 = vmatprep.subr.mxu0 0.0
    %212 = vmatpush2.msra.mxu0 %v124
    %213 = vmatprep.subr.mxu0 0.0
    %214 = vmatpush2.msra.mxu0 %v123
    %215 = vmatprep.subr.mxu0 0.0
    %216 = vmatpush2.msra.mxu0 %v122
    %217 = vmatprep.subr.mxu0 0.0
    %218 = vmatpush2.msra.mxu0 %v121
    %219 = vmatprep.subr.mxu0 0.0
    %220 = vmatpush2.msra.mxu0 %v120
    %221 = vmatprep.subr.mxu0 0.0
    %222 = vmatpush2.msra.mxu0 %v119
    %223 = vmatprep.subr.mxu0 0.0
    %224 = vmatpush2.msra.mxu0 %v118
    %225 = vmatprep.subr.mxu0 0.0
    %226 = vmatpush2.msra.mxu0 %v117
    %227 = vmatprep.subr.mxu0 0.0
    %228 = vmatpush2.msra.mxu0 %v116
    %229 = vmatprep.subr.mxu0 0.0
    %230 = vmatpush2.msra.mxu0 %v115
    %231 = vmatprep.subr.mxu0 0.0
    %232 = vmatpush2.msra.mxu0 %v114
    %233 = vmatprep.mubr.f32.mxu0 %v83
    %234 = vmatmul.mubr.f32.gmra.mxu0 %v82
    %v235 = vpop.f32.mrf.mxu0
    %v236 = vadd.f32 %v167, %v235
    %v237 = vpop.f32.mrf.mxu0
    %238 = vmatprep.mubr.f32.mxu0 %v87
    %239 = vmatmul.mubr.f32.gmra.mxu0 %v86
    %v240 = vpop.f32.mrf.mxu0
    %v241 = vadd.f32 %v167, %v240
    %v242 = vpop.f32.mrf.mxu0
    %243 = vmatprep.mubr.f32.mxu0 %v91
    %244 = vmatmul.mubr.f32.gmra.mxu0 %v90
    %v245 = vpop.f32.mrf.mxu0
    %v246 = vadd.f32 %v167, %v245
    %v247 = vpop.f32.mrf.mxu0
    %248 = vmatprep.mubr.f32.mxu0 %v95
    %249 = vmatmul.mubr.f32.gmra.mxu0 %v94
    %v250 = vpop.f32.mrf.mxu0
    %v251 = vadd.f32 %v167, %v250
    %v252 = vpop.f32.mrf.mxu0
    %253 = vdwg.mxu0
    %254 = vmatprep.subr.mxu0 0.0
    %255 = vmatpush1.msra.mxu0 %v145
    %256 = vmatprep.subr.mxu0 0.0
    %257 = vmatpush1.msra.mxu0 %v144
    %258 = vmatprep.subr.mxu0 0.0
    %259 = vmatpush1.msra.mxu0 %v143
    %260 = vmatprep.subr.mxu0 0.0
    %261 = vmatpush1.msra.mxu0 %v142
    %262 = vmatprep.subr.mxu0 0.0
    %263 = vmatpush1.msra.mxu0 %v141
    %264 = vmatprep.subr.mxu0 0.0
    %265 = vmatpush1.msra.mxu0 %v140
    %266 = vmatprep.subr.mxu0 0.0
    %267 = vmatpush1.msra.mxu0 %v139
    %268 = vmatprep.subr.mxu0 0.0
    %269 = vmatpush1.msra.mxu0 %v138
    %270 = vmatprep.subr.mxu0 0.0
    %271 = vmatpush1.msra.mxu0 %v137
    %272 = vmatprep.subr.mxu0 0.0
    %273 = vmatpush1.msra.mxu0 %v136
    %274 = vmatprep.subr.mxu0 0.0
    %275 = vmatpush1.msra.mxu0 %v135
    %276 = vmatprep.subr.mxu0 0.0
    %277 = vmatpush1.msra.mxu0 %v134
    %278 = vmatprep.subr.mxu0 0.0
    %279 = vmatpush1.msra.mxu0 %v133
    %280 = vmatprep.subr.mxu0 0.0
    %281 = vmatpush1.msra.mxu0 %v132
    %282 = vmatprep.subr.mxu0 0.0
    %283 = vmatpush1.msra.mxu0 %v131
    %284 = vmatprep.subr.mxu0 0.0
    %285 = vmatpush1.msra.mxu0 %v130
    %286 = vmatprep.subr.mxu0 0.0
    %287 = vmatpush2.msra.mxu0 %v161
    %288 = vmatprep.subr.mxu0 0.0
    %289 = vmatpush2.msra.mxu0 %v160
    %290 = vmatprep.subr.mxu0 0.0
    %291 = vmatpush2.msra.mxu0 %v159
    %292 = vmatprep.subr.mxu0 0.0
    %293 = vmatpush2.msra.mxu0 %v158
    %294 = vmatprep.subr.mxu0 0.0
    %295 = vmatpush2.msra.mxu0 %v157
    %296 = vmatprep.subr.mxu0 0.0
    %297 = vmatpush2.msra.mxu0 %v156
    %298 = vmatprep.subr.mxu0 0.0
    %299 = vmatpush2.msra.mxu0 %v155
    %300 = vmatprep.subr.mxu0 0.0
    %301 = vmatpush2.msra.mxu0 %v154
    %302 = vmatprep.subr.mxu0 0.0
    %303 = vmatpush2.msra.mxu0 %v153
    %304 = vmatprep.subr.mxu0 0.0
    %305 = vmatpush2.msra.mxu0 %v152
    %306 = vmatprep.subr.mxu0 0.0
    %307 = vmatpush2.msra.mxu0 %v151
    %308 = vmatprep.subr.mxu0 0.0
    %309 = vmatpush2.msra.mxu0 %v150
    %310 = vmatprep.subr.mxu0 0.0
    %311 = vmatpush2.msra.mxu0 %v149
    %312 = vmatprep.subr.mxu0 0.0
    %313 = vmatpush2.msra.mxu0 %v148
    %314 = vmatprep.subr.mxu0 0.0
    %315 = vmatpush2.msra.mxu0 %v147
    %316 = vmatprep.subr.mxu0 0.0
    %317 = vmatpush2.msra.mxu0 %v146
    %318 = vmatprep.mubr.f32.mxu0 %v85
    %319 = vmatmul.mubr.f32.gmra.mxu0 %v84
    %v320 = vpop.f32.mrf.mxu0
    %v321 = vadd.f32 %v236, %v320
    %v322 = vpop.f32.mrf.mxu0
    %323 = vmatprep.mubr.f32.mxu0 %v89
    %324 = vmatmul.mubr.f32.gmra.mxu0 %v88
    %v325 = vpop.f32.mrf.mxu0
    %v326 = vadd.f32 %v241, %v325
    %v327 = vpop.f32.mrf.mxu0
    %328 = vmatprep.mubr.f32.mxu0 %v93
    %329 = vmatmul.mubr.f32.gmra.mxu0 %v92
    %v330 = vpop.f32.mrf.mxu0
    %v331 = vadd.f32 %v246, %v330
    %v332 = vpop.f32.mrf.mxu0
    %333 = vmatprep.mubr.f32.mxu0 %v97
    %334 = vmatmul.mubr.f32.gmra.mxu0 %v96
    %v335 = vpop.f32.mrf.mxu0
    %v336 = vadd.f32 %v251, %v335
    %v337 = vpop.f32.mrf.mxu0
    %338 = vdwg.mxu0
    %v339 = vmax.f32 %v321, 0.0
    %v340 = vmax.f32 %v326, 0.0
    %v341 = vmax.f32 %v331, 0.0
    %v342 = vmax.f32 %v336, 0.0
    %v343 = vlaneseq
    %v344 = vshrl.u32 %v343, 7
    %v345 = vadd.s32 %v344, 8
    %v346 = vadd.s32 %v344, 16
    %v347 = vadd.s32 %v344, 24
    %vm348 = vcmp.lt.s32.totalorder %v344, 0
    %v349 = vsub.s32 0, %v344
    %v350 = vsel %vm348, %v349, %v344
    %v351 = vshrl.u32 %v350, 4
    %v352 = vand.u32 %v350, 15
    %v353 = vsub.s32 0, %v352
    %v354 = vsel %vm348, %v353, %v352
    %vm355 = vcmp.lt.s32.totalorder %v345, 0
    %v356 = vsub.s32 0, %v345
    %v357 = vsel %vm355, %v356, %v345
    %v358 = vshrl.u32 %v357, 4
    %v359 = vand.u32 %v357, 15
    %v360 = vsub.s32 0, %v359
    %v361 = vsel %vm355, %v360, %v359
    %vm362 = vcmp.lt.s32.totalorder %v346, 0
    %v363 = vsub.s32 0, %v346
    %v364 = vsel %vm362, %v363, %v346
    %v365 = vshrl.u32 %v364, 4
    %v366 = vand.u32 %v364, 15
    %v367 = vsub.s32 0, %v366
    %v368 = vsel %vm362, %v367, %v366
    %vm369 = vcmp.lt.s32.totalorder %v347, 0
    %v370 = vsub.s32 0, %v347
    %v371 = vsel %vm369, %v370, %v347
    %v372 = vshrl.u32 %v371, 4
    %v373 = vand.u32 %v371, 15
    %v374 = vsub.s32 0, %v373
    %v375 = vsel %vm369, %v374, %v373
    %vm376 = vcmp.ne.s32.totalorder %v354, 0
    %vm377 = vcmp.ne.s32.totalorder %v361, 0
    %vm378 = vcmp.ne.s32.totalorder %v368, 0
    %vm379 = vcmp.ne.s32.totalorder %v375, 0
    %vm380 = vcmp.lt.s32.totalorder %v354, 0
    %vm381 = vcmp.lt.s32.totalorder %v361, 0
    %vm382 = vcmp.lt.s32.totalorder %v368, 0
    %vm383 = vcmp.lt.s32.totalorder %v375, 0
    %vm384 = vmand %vm380, %vm376
    %vm385 = vmand %vm381, %vm377
    %vm386 = vmand %vm382, %vm378
    %vm387 = vmand %vm383, %vm379
    %v388 = vadd.s32 %v354, 16
    %v389 = vadd.s32 %v361, 16
    %v390 = vadd.s32 %v368, 16
    %v391 = vadd.s32 %v375, 16
    %v392 = vsel %vm384, %v388, %v354
    %v393 = vsel %vm385, %v389, %v361
    %v394 = vsel %vm386, %v390, %v368
    %v395 = vsel %vm387, %v391, %v375
    %vm396 = vcmp.ne.s32.totalorder %v392, 0
    %vm397 = vcmp.ne.s32.totalorder %v393, 0
    %vm398 = vcmp.ne.s32.totalorder %v394, 0
    %vm399 = vcmp.ne.s32.totalorder %v395, 0
    %v400 = vrot.slane %v339, 7
    %v401 = vrot.slane %v340, 7
    %v402 = vrot.slane %v341, 7
    %v403 = vrot.slane %v342, 7
    %vm404 = vcmp.lt.s32.totalorder %v344, 1
    %v405 = vsel %vm404, %v402, %v403
    %v406 = vsel %vm404, %v401, %v402
    %v407 = vsel %vm404, %v400, %v401
    %v408 = vsel %vm404, %v403, %v400
    %v409 = vsel %vm396, %v408, 0.0
    %v410 = vsel %vm397, %v407, 0.0
    %v411 = vsel %vm398, %v406, 0.0
    %v412 = vsel %vm399, %v405, 0.0
    %vm413 = vcmp.ne.s32.totalorder %v392, 15
    %vm414 = vcmp.ne.s32.totalorder %v393, 15
    %vm415 = vcmp.ne.s32.totalorder %v394, 15
    %vm416 = vcmp.ne.s32.totalorder %v395, 15
    %v417 = vrot.slane %v339, 1
    %v418 = vrot.slane %v340, 1
    %v419 = vrot.slane %v341, 1
    %v420 = vrot.slane %v342, 1
    %vm421 = vcmp.lt.s32.totalorder %v344, 7
    %v422 = vsel %vm421, %v419, %v420
    %v423 = vsel %vm421, %v418, %v419
    %v424 = vsel %vm421, %v417, %v418
    %v425 = vsel %vm421, %v420, %v417
    %v426 = vsel %vm413, %v424, 0.0
    %v427 = vsel %vm414, %v423, 0.0
    %v428 = vsel %vm415, %v422, 0.0
    %v429 = vsel %vm416, %v425, 0.0
    %v430 = vld [vmem:[#allocation7] sm:$0xff]
    %v431 = vld [vmem:[#allocation7 + $0x8] sm:$0xff]
    %v432 = vld [vmem:[#allocation7 + $0x10] sm:$0xff]
    %v433 = vld [vmem:[#allocation7 + $0x18] sm:$0xff]
    %v434 = vld [vmem:[#allocation7 + $0x20] sm:$0xff]
    %v435 = vld [vmem:[#allocation7 + $0x28] sm:$0xff]
    %v436 = vld [vmem:[#allocation7 + $0x30] sm:$0xff]
    %v437 = vld [vmem:[#allocation7 + $0x38] sm:$0xff]
    %v438 = vld [vmem:[#allocation7 + $0x40] sm:$0xff]
    %v439 = vld [vmem:[#allocation7 + $0x48] sm:$0xff]
    %v440 = vld [vmem:[#allocation7 + $0x50] sm:$0xff]
    %v441 = vld [vmem:[#allocation7 + $0x58] sm:$0xff]
    %v442 = vld [vmem:[#allocation7 + $0x60] sm:$0xff]
    %v443 = vld [vmem:[#allocation7 + $0x68] sm:$0xff]
    %v444 = vld [vmem:[#allocation7 + $0x70] sm:$0xff]
    %v445 = vld [vmem:[#allocation7 + $0x78] sm:$0xff]
    %v446 = vld [vmem:[#allocation7 + $0x80] sm:$0xff]
    %v447 = vld [vmem:[#allocation7 + $0x88] sm:$0xff]
    %v448 = vld [vmem:[#allocation7 + $0x90] sm:$0xff]
    %v449 = vld [vmem:[#allocation7 + $0x98] sm:$0xff]
    %v450 = vld [vmem:[#allocation7 + $0xa0] sm:$0xff]
    %v451 = vld [vmem:[#allocation7 + $0xa8] sm:$0xff]
    %v452 = vld [vmem:[#allocation7 + $0xb0] sm:$0xff]
    %v453 = vld [vmem:[#allocation7 + $0xb8] sm:$0xff]
    %v454 = vld [vmem:[#allocation7 + $0xc0] sm:$0xff]
    %v455 = vld [vmem:[#allocation7 + $0xc8] sm:$0xff]
    %v456 = vld [vmem:[#allocation7 + $0xd0] sm:$0xff]
    %v457 = vld [vmem:[#allocation7 + $0xd8] sm:$0xff]
    %v458 = vld [vmem:[#allocation7 + $0xe0] sm:$0xff]
    %v459 = vld [vmem:[#allocation7 + $0xe8] sm:$0xff]
    %v460 = vld [vmem:[#allocation7 + $0xf0] sm:$0xff]
    %v461 = vld [vmem:[#allocation7 + $0xf8] sm:$0xff]
    %v462 = vld [vmem:[#allocation7 + $0x100] sm:$0xff]
    %v463 = vld [vmem:[#allocation7 + $0x108] sm:$0xff]
    %v464 = vld [vmem:[#allocation7 + $0x110] sm:$0xff]
    %v465 = vld [vmem:[#allocation7 + $0x118] sm:$0xff]
    %v466 = vld [vmem:[#allocation7 + $0x120] sm:$0xff]
    %v467 = vld [vmem:[#allocation7 + $0x128] sm:$0xff]
    %v468 = vld [vmem:[#allocation7 + $0x130] sm:$0xff]
    %v469 = vld [vmem:[#allocation7 + $0x138] sm:$0xff]
    %v470 = vld [vmem:[#allocation7 + $0x140] sm:$0xff]
    %v471 = vld [vmem:[#allocation7 + $0x148] sm:$0xff]
    %v472 = vld [vmem:[#allocation7 + $0x150] sm:$0xff]
    %v473 = vld [vmem:[#allocation7 + $0x158] sm:$0xff]
    %v474 = vld [vmem:[#allocation7 + $0x160] sm:$0xff]
    %v475 = vld [vmem:[#allocation7 + $0x168] sm:$0xff]
    %v476 = vld [vmem:[#allocation7 + $0x170] sm:$0xff]
    %v477 = vld [vmem:[#allocation7 + $0x178] sm:$0xff]
    %v478 = vld [vmem:[%s4] sm:$0x1]
    %v480 = vlaneseq
    %v481 = vshrl.u32 %v480, 7
    %v482 = vsub.s32 0, %v481
    %v483 = vrot.slane %v478, %v482
    %485 = vmatprep.subr.mxu0 0.0
    %486 = vmatpush1.msra.mxu0 %v445
    %487 = vmatprep.subr.mxu0 0.0
    %488 = vmatpush1.msra.mxu0 %v444
    %489 = vmatprep.subr.mxu0 0.0
    %490 = vmatpush1.msra.mxu0 %v443
    %491 = vmatprep.subr.mxu0 0.0
    %492 = vmatpush1.msra.mxu0 %v442
    %493 = vmatprep.subr.mxu0 0.0
    %494 = vmatpush1.msra.mxu0 %v441
    %495 = vmatprep.subr.mxu0 0.0
    %496 = vmatpush1.msra.mxu0 %v440
    %497 = vmatprep.subr.mxu0 0.0
    %498 = vmatpush1.msra.mxu0 %v439
    %499 = vmatprep.subr.mxu0 0.0
    %500 = vmatpush1.msra.mxu0 %v438
    %501 = vmatprep.subr.mxu0 0.0
    %502 = vmatpush1.msra.mxu0 %v437
    %503 = vmatprep.subr.mxu0 0.0
    %504 = vmatpush1.msra.mxu0 %v436
    %505 = vmatprep.subr.mxu0 0.0
    %506 = vmatpush1.msra.mxu0 %v435
    %507 = vmatprep.subr.mxu0 0.0
    %508 = vmatpush1.msra.mxu0 %v434
    %509 = vmatprep.subr.mxu0 0.0
    %510 = vmatpush1.msra.mxu0 %v433
    %511 = vmatprep.subr.mxu0 0.0
    %512 = vmatpush1.msra.mxu0 %v432
    %513 = vmatprep.subr.mxu0 0.0
    %514 = vmatpush1.msra.mxu0 %v431
    %515 = vmatprep.subr.mxu0 0.0
    %516 = vmatpush1.msra.mxu0 %v430
    %517 = vmatprep.subr.mxu0 0.0
    %518 = vmatpush2.msra.mxu0 %v461
    %519 = vmatprep.subr.mxu0 0.0
    %520 = vmatpush2.msra.mxu0 %v460
    %521 = vmatprep.subr.mxu0 0.0
    %522 = vmatpush2.msra.mxu0 %v459
    %523 = vmatprep.subr.mxu0 0.0
    %524 = vmatpush2.msra.mxu0 %v458
    %525 = vmatprep.subr.mxu0 0.0
    %526 = vmatpush2.msra.mxu0 %v457
    %527 = vmatprep.subr.mxu0 0.0
    %528 = vmatpush2.msra.mxu0 %v456
    %529 = vmatprep.subr.mxu0 0.0
    %530 = vmatpush2.msra.mxu0 %v455
    %531 = vmatprep.subr.mxu0 0.0
    %532 = vmatpush2.msra.mxu0 %v454
    %533 = vmatprep.subr.mxu0 0.0
    %534 = vmatpush2.msra.mxu0 %v453
    %535 = vmatprep.subr.mxu0 0.0
    %536 = vmatpush2.msra.mxu0 %v452
    %537 = vmatprep.subr.mxu0 0.0
    %538 = vmatpush2.msra.mxu0 %v451
    %539 = vmatprep.subr.mxu0 0.0
    %540 = vmatpush2.msra.mxu0 %v450
    %541 = vmatprep.subr.mxu0 0.0
    %542 = vmatpush2.msra.mxu0 %v449
    %543 = vmatprep.subr.mxu0 0.0
    %544 = vmatpush2.msra.mxu0 %v448
    %545 = vmatprep.subr.mxu0 0.0
    %546 = vmatpush2.msra.mxu0 %v447
    %547 = vmatprep.subr.mxu0 0.0
    %548 = vmatpush2.msra.mxu0 %v446
    %549 = vmatprep.mubr.f32.mxu0 %v339
    %550 = vmatmul.mubr.f32.gmra.mxu0 %v409
    %v551 = vpop.f32.mrf.mxu0
    %v552 = vadd.f32 %v483, %v551
    %v553 = vpop.f32.mrf.mxu0
    %554 = vmatprep.mubr.f32.mxu0 %v340
    %555 = vmatmul.mubr.f32.gmra.mxu0 %v410
    %v556 = vpop.f32.mrf.mxu0
    %v557 = vadd.f32 %v483, %v556
    %v558 = vpop.f32.mrf.mxu0
    %559 = vmatprep.mubr.f32.mxu0 %v341
    %560 = vmatmul.mubr.f32.gmra.mxu0 %v411
    %v561 = vpop.f32.mrf.mxu0
    %v562 = vadd.f32 %v483, %v561
    %v563 = vpop.f32.mrf.mxu0
    %564 = vmatprep.mubr.f32.mxu0 %v342
    %565 = vmatmul.mubr.f32.gmra.mxu0 %v412
    %v566 = vpop.f32.mrf.mxu0
    %v567 = vadd.f32 %v483, %v566
    %v568 = vpop.f32.mrf.mxu0
    %569 = vdwg.mxu0
    %570 = vmatprep.subr.mxu0 0.0
    %571 = vmatpush1.msra.mxu0 %v477
    %572 = vmatprep.subr.mxu0 0.0
    %573 = vmatpush1.msra.mxu0 %v476
    %574 = vmatprep.subr.mxu0 0.0
    %575 = vmatpush1.msra.mxu0 %v475
    %576 = vmatprep.subr.mxu0 0.0
    %577 = vmatpush1.msra.mxu0 %v474
    %578 = vmatprep.subr.mxu0 0.0
    %579 = vmatpush1.msra.mxu0 %v473
    %580 = vmatprep.subr.mxu0 0.0
    %581 = vmatpush1.msra.mxu0 %v472
    %582 = vmatprep.subr.mxu0 0.0
    %583 = vmatpush1.msra.mxu0 %v471
    %584 = vmatprep.subr.mxu0 0.0
    %585 = vmatpush1.msra.mxu0 %v470
    %586 = vmatprep.subr.mxu0 0.0
    %587 = vmatpush1.msra.mxu0 %v469
    %588 = vmatprep.subr.mxu0 0.0
    %589 = vmatpush1.msra.mxu0 %v468
    %590 = vmatprep.subr.mxu0 0.0
    %591 = vmatpush1.msra.mxu0 %v467
    %592 = vmatprep.subr.mxu0 0.0
    %593 = vmatpush1.msra.mxu0 %v466
    %594 = vmatprep.subr.mxu0 0.0
    %595 = vmatpush1.msra.mxu0 %v465
    %596 = vmatprep.subr.mxu0 0.0
    %597 = vmatpush1.msra.mxu0 %v464
    %598 = vmatprep.subr.mxu0 0.0
    %599 = vmatpush1.msra.mxu0 %v463
    %600 = vmatprep.subr.mxu0 0.0
    %601 = vmatpush1.msra.mxu0 %v462
    %602 = vmatprep.subr.mxu0 0.0
    %603 = vmatpush2.msra.mxu0 0.0
    %604 = vmatprep.subr.mxu0 0.0
    %605 = vmatpush2.msra.mxu0 0.0
    %606 = vmatprep.subr.mxu0 0.0
    %607 = vmatpush2.msra.mxu0 0.0
    %608 = vmatprep.subr.mxu0 0.0
    %609 = vmatpush2.msra.mxu0 0.0
    %610 = vmatprep.subr.mxu0 0.0
    %611 = vmatpush2.msra.mxu0 0.0
    %612 = vmatprep.subr.mxu0 0.0
    %613 = vmatpush2.msra.mxu0 0.0
    %614 = vmatprep.subr.mxu0 0.0
    %615 = vmatpush2.msra.mxu0 0.0
    %616 = vmatprep.subr.mxu0 0.0
    %617 = vmatpush2.msra.mxu0 0.0
    %618 = vmatprep.subr.mxu0 0.0
    %619 = vmatpush2.msra.mxu0 0.0
    %620 = vmatprep.subr.mxu0 0.0
    %621 = vmatpush2.msra.mxu0 0.0
    %622 = vmatprep.subr.mxu0 0.0
    %623 = vmatpush2.msra.mxu0 0.0
    %624 = vmatprep.subr.mxu0 0.0
    %625 = vmatpush2.msra.mxu0 0.0
    %626 = vmatprep.subr.mxu0 0.0
    %627 = vmatpush2.msra.mxu0 0.0
    %628 = vmatprep.subr.mxu0 0.0
    %629 = vmatpush2.msra.mxu0 0.0
    %630 = vmatprep.subr.mxu0 0.0
    %631 = vmatpush2.msra.mxu0 0.0
    %632 = vmatprep.subr.mxu0 0.0
    %633 = vmatpush2.msra.mxu0 0.0
    %634 = vmatprep.mubr.f32.mxu0 0.0
    %635 = vmatmul.mubr.f32.gmra.mxu0 %v426
    %v636 = vpop.f32.mrf.mxu0
    %v637 = vadd.f32 %v552, %v636
    %v638 = vpop.f32.mrf.mxu0
    %639 = vmatprep.mubr.f32.mxu0 0.0
    %640 = vmatmul.mubr.f32.gmra.mxu0 %v427
    %v641 = vpop.f32.mrf.mxu0
    %v642 = vadd.f32 %v557, %v641
    %v643 = vpop.f32.mrf.mxu0
    %644 = vmatprep.mubr.f32.mxu0 0.0
    %645 = vmatmul.mubr.f32.gmra.mxu0 %v428
    %v646 = vpop.f32.mrf.mxu0
    %v647 = vadd.f32 %v562, %v646
    %v648 = vpop.f32.mrf.mxu0
    %649 = vmatprep.mubr.f32.mxu0 0.0
    %650 = vmatmul.mubr.f32.gmra.mxu0 %v429
    %v651 = vpop.f32.mrf.mxu0
    %v652 = vadd.f32 %v567, %v651
    %v653 = vpop.f32.mrf.mxu0
    %654 = vdwg.mxu0
    %v655 = vmax.f32 %v637, 0.0
    %v656 = vmax.f32 %v642, 0.0
    %v657 = vmax.f32 %v647, 0.0
    %v658 = vmax.f32 %v652, 0.0
    %v659 = vld [vmem:[#allocation8] sm:$0xff]
    %v660 = vld [vmem:[#allocation8 + $0x8] sm:$0xff]
    %v661 = vld [vmem:[#allocation8 + $0x10] sm:$0xff]
    %v662 = vld [vmem:[#allocation8 + $0x18] sm:$0xff]
    %v663 = vld [vmem:[#allocation8 + $0x20] sm:$0xff]
    %v664 = vld [vmem:[#allocation8 + $0x28] sm:$0xff]
    %v665 = vld [vmem:[#allocation8 + $0x30] sm:$0xff]
    %v666 = vld [vmem:[#allocation8 + $0x38] sm:$0xff]
    %v667 = vld [vmem:[#allocation8 + $0x40] sm:$0xff]
    %v668 = vld [vmem:[#allocation8 + $0x48] sm:$0xff]
    %v669 = vld [vmem:[#allocation8 + $0x50] sm:$0xff]
    %v670 = vld [vmem:[#allocation8 + $0x58] sm:$0xff]
    %v671 = vld [vmem:[#allocation8 + $0x60] sm:$0xff]
    %v672 = vld [vmem:[#allocation8 + $0x68] sm:$0xff]
    %v673 = vld [vmem:[#allocation8 + $0x70] sm:$0xff]
    %v674 = vld [vmem:[#allocation8 + $0x78] sm:$0xff]
    %v675 = vld [vmem:[#allocation8 + $0x80] sm:$0xff]
    %v676 = vld [vmem:[#allocation8 + $0x88] sm:$0xff]
    %v677 = vld [vmem:[#allocation8 + $0x90] sm:$0xff]
    %v678 = vld [vmem:[#allocation8 + $0x98] sm:$0xff]
    %v679 = vld [vmem:[#allocation8 + $0xa0] sm:$0xff]
    %v680 = vld [vmem:[#allocation8 + $0xa8] sm:$0xff]
    %v681 = vld [vmem:[#allocation8 + $0xb0] sm:$0xff]
    %v682 = vld [vmem:[#allocation8 + $0xb8] sm:$0xff]
    %v683 = vld [vmem:[#allocation8 + $0xc0] sm:$0xff]
    %v684 = vld [vmem:[#allocation8 + $0xc8] sm:$0xff]
    %v685 = vld [vmem:[#allocation8 + $0xd0] sm:$0xff]
    %v686 = vld [vmem:[#allocation8 + $0xd8] sm:$0xff]
    %v687 = vld [vmem:[#allocation8 + $0xe0] sm:$0xff]
    %v688 = vld [vmem:[#allocation8 + $0xe8] sm:$0xff]
    %v689 = vld [vmem:[#allocation8 + $0xf0] sm:$0xff]
    %v690 = vld [vmem:[#allocation8 + $0xf8] sm:$0xff]
    %v691 = vld [vmem:[#allocation8 + $0x100] sm:$0xff]
    %v692 = vld [vmem:[#allocation8 + $0x108] sm:$0xff]
    %v693 = vld [vmem:[#allocation8 + $0x110] sm:$0xff]
    %v694 = vld [vmem:[#allocation8 + $0x118] sm:$0xff]
    %v695 = vld [vmem:[#allocation8 + $0x120] sm:$0xff]
    %v696 = vld [vmem:[#allocation8 + $0x128] sm:$0xff]
    %v697 = vld [vmem:[#allocation8 + $0x130] sm:$0xff]
    %v698 = vld [vmem:[#allocation8 + $0x138] sm:$0xff]
    %v699 = vld [vmem:[#allocation8 + $0x140] sm:$0xff]
    %v700 = vld [vmem:[#allocation8 + $0x148] sm:$0xff]
    %v701 = vld [vmem:[#allocation8 + $0x150] sm:$0xff]
    %v702 = vld [vmem:[#allocation8 + $0x158] sm:$0xff]
    %v703 = vld [vmem:[#allocation8 + $0x160] sm:$0xff]
    %v704 = vld [vmem:[#allocation8 + $0x168] sm:$0xff]
    %v705 = vld [vmem:[#allocation8 + $0x170] sm:$0xff]
    %v706 = vld [vmem:[#allocation8 + $0x178] sm:$0xff]
    %v707 = vld [vmem:[#allocation8 + $0x180] sm:$0xff]
    %v708 = vld [vmem:[#allocation8 + $0x188] sm:$0xff]
    %v709 = vld [vmem:[#allocation8 + $0x190] sm:$0xff]
    %v710 = vld [vmem:[#allocation8 + $0x198] sm:$0xff]
    %v711 = vld [vmem:[#allocation8 + $0x1a0] sm:$0xff]
    %v712 = vld [vmem:[#allocation8 + $0x1a8] sm:$0xff]
    %v713 = vld [vmem:[#allocation8 + $0x1b0] sm:$0xff]
    %v714 = vld [vmem:[#allocation8 + $0x1b8] sm:$0xff]
    %v715 = vld [vmem:[#allocation8 + $0x1c0] sm:$0xff]
    %v716 = vld [vmem:[#allocation8 + $0x1c8] sm:$0xff]
    %v717 = vld [vmem:[#allocation8 + $0x1d0] sm:$0xff]
    %v718 = vld [vmem:[#allocation8 + $0x1d8] sm:$0xff]
    %v719 = vld [vmem:[#allocation8 + $0x1e0] sm:$0xff]
    %v720 = vld [vmem:[#allocation8 + $0x1e8] sm:$0xff]
    %v721 = vld [vmem:[#allocation8 + $0x1f0] sm:$0xff]
    %v722 = vld [vmem:[#allocation8 + $0x1f8] sm:$0xff]
    %v723 = vld [vmem:[%s6] sm:$0xf]
    %v725 = vlaneseq
    %v726 = vshrl.u32 %v725, 7
    %v727 = vsub.s32 0, %v726
    %v728 = vrot.slane %v723, %v727
    %v729 = vlaneseq
    %v730 = vshrl.u32 %v729, 7
    %v731 = vsub.s32 1, %v730
    %v732 = vrot.slane %v723, %v731
    %v733 = vlaneseq
    %v734 = vshrl.u32 %v733, 7
    %v735 = vsub.s32 2, %v734
    %v736 = vrot.slane %v723, %v735
    %v737 = vlaneseq
    %v738 = vshrl.u32 %v737, 7
    %v739 = vsub.s32 3, %v738
    %v740 = vrot.slane %v723, %v739
    %745 = vmatprep.subr.mxu0 %v720
    %746 = vmatpush1.msra.mxu0 %v719
    %747 = vmatprep.subr.mxu0 %v716
    %748 = vmatpush1.msra.mxu0 %v715
    %749 = vmatprep.subr.mxu0 %v712
    %750 = vmatpush1.msra.mxu0 %v711
    %751 = vmatprep.subr.mxu0 %v708
    %752 = vmatpush1.msra.mxu0 %v707
    %753 = vmatprep.subr.mxu0 %v704
    %754 = vmatpush1.msra.mxu0 %v703
    %755 = vmatprep.subr.mxu0 %v700
    %756 = vmatpush1.msra.mxu0 %v699
    %757 = vmatprep.subr.mxu0 %v696
    %758 = vmatpush1.msra.mxu0 %v695
    %759 = vmatprep.subr.mxu0 %v692
    %760 = vmatpush1.msra.mxu0 %v691
    %761 = vmatprep.subr.mxu0 %v688
    %762 = vmatpush1.msra.mxu0 %v687
    %763 = vmatprep.subr.mxu0 %v684
    %764 = vmatpush1.msra.mxu0 %v683
    %765 = vmatprep.subr.mxu0 %v680
    %766 = vmatpush1.msra.mxu0 %v679
    %767 = vmatprep.subr.mxu0 %v676
    %768 = vmatpush1.msra.mxu0 %v675
    %769 = vmatprep.subr.mxu0 %v672
    %770 = vmatpush1.msra.mxu0 %v671
    %771 = vmatprep.subr.mxu0 %v668
    %772 = vmatpush1.msra.mxu0 %v667
    %773 = vmatprep.subr.mxu0 %v664
    %774 = vmatpush1.msra.mxu0 %v663
    %775 = vmatprep.subr.mxu0 %v660
    %776 = vmatpush1.msra.mxu0 %v659
    %777 = vmatprep.subr.mxu0 0.0
    %778 = vmatpush2.msra.mxu0 0.0
    %779 = vmatprep.subr.mxu0 0.0
    %780 = vmatpush2.msra.mxu0 0.0
    %781 = vmatprep.subr.mxu0 0.0
    %782 = vmatpush2.msra.mxu0 0.0
    %783 = vmatprep.subr.mxu0 0.0
    %784 = vmatpush2.msra.mxu0 0.0
    %785 = vmatprep.subr.mxu0 0.0
    %786 = vmatpush2.msra.mxu0 0.0
    %787 = vmatprep.subr.mxu0 0.0
    %788 = vmatpush2.msra.mxu0 0.0
    %789 = vmatprep.subr.mxu0 0.0
    %790 = vmatpush2.msra.mxu0 0.0
    %791 = vmatprep.subr.mxu0 0.0
    %792 = vmatpush2.msra.mxu0 0.0
    %793 = vmatprep.subr.mxu0 0.0
    %794 = vmatpush2.msra.mxu0 0.0
    %795 = vmatprep.subr.mxu0 0.0
    %796 = vmatpush2.msra.mxu0 0.0
    %797 = vmatprep.subr.mxu0 0.0
    %798 = vmatpush2.msra.mxu0 0.0
    %799 = vmatprep.subr.mxu0 0.0
    %800 = vmatpush2.msra.mxu0 0.0
    %801 = vmatprep.subr.mxu0 0.0
    %802 = vmatpush2.msra.mxu0 0.0
    %803 = vmatprep.subr.mxu0 0.0
    %804 = vmatpush2.msra.mxu0 0.0
    %805 = vmatprep.subr.mxu0 0.0
    %806 = vmatpush2.msra.mxu0 0.0
    %807 = vmatprep.subr.mxu0 0.0
    %808 = vmatpush2.msra.mxu0 0.0
    %809 = vmatprep.mubr.f32.mxu0 0.0
    %810 = vmatmul.mubr.f32.gmra.mxu0 %v655
    %v811 = vpop.f32.mrf.mxu0
    %v812 = vadd.f32 %v728, %v811
    %v813 = vpop.f32.mrf.mxu0
    %v814 = vadd.f32 %v732, %v813
    %815 = vmatprep.mubr.f32.mxu0 0.0
    %816 = vmatmul.mubr.f32.gmra.mxu0 %v656
    %v817 = vpop.f32.mrf.mxu0
    %v818 = vadd.f32 %v728, %v817
    %v819 = vpop.f32.mrf.mxu0
    %v820 = vadd.f32 %v732, %v819
    %821 = vmatprep.mubr.f32.mxu0 0.0
    %822 = vmatmul.mubr.f32.gmra.mxu0 %v657
    %v823 = vpop.f32.mrf.mxu0
    %v824 = vadd.f32 %v728, %v823
    %v825 = vpop.f32.mrf.mxu0
    %v826 = vadd.f32 %v732, %v825
    %827 = vmatprep.mubr.f32.mxu0 0.0
    %828 = vmatmul.mubr.f32.gmra.mxu0 %v658
    %v829 = vpop.f32.mrf.mxu0
    %v830 = vadd.f32 %v728, %v829
    %v831 = vpop.f32.mrf.mxu0
    %v832 = vadd.f32 %v732, %v831
    %833 = vdwg.mxu0
    %834 = vmatprep.subr.mxu0 %v722
    %835 = vmatpush1.msra.mxu0 %v721
    %836 = vmatprep.subr.mxu0 %v718
    %837 = vmatpush1.msra.mxu0 %v717
    %838 = vmatprep.subr.mxu0 %v714
    %839 = vmatpush1.msra.mxu0 %v713
    %840 = vmatprep.subr.mxu0 %v710
    %841 = vmatpush1.msra.mxu0 %v709
    %842 = vmatprep.subr.mxu0 %v706
    %843 = vmatpush1.msra.mxu0 %v705
    %844 = vmatprep.subr.mxu0 %v702
    %845 = vmatpush1.msra.mxu0 %v701
    %846 = vmatprep.subr.mxu0 %v698
    %847 = vmatpush1.msra.mxu0 %v697
    %848 = vmatprep.subr.mxu0 %v694
    %849 = vmatpush1.msra.mxu0 %v693
    %850 = vmatprep.subr.mxu0 %v690
    %851 = vmatpush1.msra.mxu0 %v689
    %852 = vmatprep.subr.mxu0 %v686
    %853 = vmatpush1.msra.mxu0 %v685
    %854 = vmatprep.subr.mxu0 %v682
    %855 = vmatpush1.msra.mxu0 %v681
    %856 = vmatprep.subr.mxu0 %v678
    %857 = vmatpush1.msra.mxu0 %v677
    %858 = vmatprep.subr.mxu0 %v674
    %859 = vmatpush1.msra.mxu0 %v673
    %860 = vmatprep.subr.mxu0 %v670
    %861 = vmatpush1.msra.mxu0 %v669
    %862 = vmatprep.subr.mxu0 %v666
    %863 = vmatpush1.msra.mxu0 %v665
    %864 = vmatprep.subr.mxu0 %v662
    %865 = vmatpush1.msra.mxu0 %v661
    %866 = vmatprep.subr.mxu0 0.0
    %867 = vmatpush2.msra.mxu0 0.0
    %868 = vmatprep.subr.mxu0 0.0
    %869 = vmatpush2.msra.mxu0 0.0
    %870 = vmatprep.subr.mxu0 0.0
    %871 = vmatpush2.msra.mxu0 0.0
    %872 = vmatprep.subr.mxu0 0.0
    %873 = vmatpush2.msra.mxu0 0.0
    %874 = vmatprep.subr.mxu0 0.0
    %875 = vmatpush2.msra.mxu0 0.0
    %876 = vmatprep.subr.mxu0 0.0
    %877 = vmatpush2.msra.mxu0 0.0
    %878 = vmatprep.subr.mxu0 0.0
    %879 = vmatpush2.msra.mxu0 0.0
    %880 = vmatprep.subr.mxu0 0.0
    %881 = vmatpush2.msra.mxu0 0.0
    %882 = vmatprep.subr.mxu0 0.0
    %883 = vmatpush2.msra.mxu0 0.0
    %884 = vmatprep.subr.mxu0 0.0
    %885 = vmatpush2.msra.mxu0 0.0
    %886 = vmatprep.subr.mxu0 0.0
    %887 = vmatpush2.msra.mxu0 0.0
    %888 = vmatprep.subr.mxu0 0.0
    %889 = vmatpush2.msra.mxu0 0.0
    %890 = vmatprep.subr.mxu0 0.0
    %891 = vmatpush2.msra.mxu0 0.0
    %892 = vmatprep.subr.mxu0 0.0
    %893 = vmatpush2.msra.mxu0 0.0
    %894 = vmatprep.subr.mxu0 0.0
    %895 = vmatpush2.msra.mxu0 0.0
    %896 = vmatprep.subr.mxu0 0.0
    %897 = vmatpush2.msra.mxu0 0.0
    %898 = vmatprep.mubr.f32.mxu0 0.0
    %899 = vmatmul.mubr.f32.gmra.mxu0 %v655
    %v900 = vpop.f32.mrf.mxu0
    %v901 = vadd.f32 %v736, %v900
    %v902 = vpop.f32.mrf.mxu0
    %v903 = vadd.f32 %v740, %v902
    %904 = vmatprep.mubr.f32.mxu0 0.0
    %905 = vmatmul.mubr.f32.gmra.mxu0 %v656
    %v906 = vpop.f32.mrf.mxu0
    %v907 = vadd.f32 %v736, %v906
    %v908 = vpop.f32.mrf.mxu0
    %v909 = vadd.f32 %v740, %v908
    %910 = vmatprep.mubr.f32.mxu0 0.0
    %911 = vmatmul.mubr.f32.gmra.mxu0 %v657
    %v912 = vpop.f32.mrf.mxu0
    %v913 = vadd.f32 %v736, %v912
    %v914 = vpop.f32.mrf.mxu0
    %v915 = vadd.f32 %v740, %v914
    %916 = vmatprep.mubr.f32.mxu0 0.0
    %917 = vmatmul.mubr.f32.gmra.mxu0 %v658
    %v918 = vpop.f32.mrf.mxu0
    %v919 = vadd.f32 %v736, %v918
    %v920 = vpop.f32.mrf.mxu0
    %v921 = vadd.f32 %v740, %v920
    %922 = vdwg.mxu0
    %v923 = vmax.f32 %v812, 0.0
    %v924 = vmax.f32 %v814, 0.0
    %v925 = vmax.f32 %v901, 0.0
    %v926 = vmax.f32 %v903, 0.0
    %v927 = vmax.f32 %v818, 0.0
    %v928 = vmax.f32 %v820, 0.0
    %v929 = vmax.f32 %v907, 0.0
    %v930 = vmax.f32 %v909, 0.0
    %v931 = vmax.f32 %v824, 0.0
    %v932 = vmax.f32 %v826, 0.0
    %v933 = vmax.f32 %v913, 0.0
    %v934 = vmax.f32 %v915, 0.0
    %v935 = vmax.f32 %v830, 0.0
    %v936 = vmax.f32 %v832, 0.0
    %v937 = vmax.f32 %v919, 0.0
    %v938 = vmax.f32 %v921, 0.0
    %v939 = vadd.f32 %v82, %v923
    %v940 = vadd.f32 %v83, %v924
    %v941 = vadd.f32 %v84, %v925
    %v942 = vadd.f32 %v85, %v926
    %v943 = vadd.f32 %v86, %v927
    %v944 = vadd.f32 %v87, %v928
    %v945 = vadd.f32 %v88, %v929
    %v946 = vadd.f32 %v89, %v930
    %v947 = vadd.f32 %v90, %v931
    %v948 = vadd.f32 %v91, %v932
    %v949 = vadd.f32 %v92, %v933
    %v950 = vadd.f32 %v93, %v934
    %v951 = vadd.f32 %v94, %v935
    %v952 = vadd.f32 %v95, %v936
    %v953 = vadd.f32 %v96, %v937
    %v954 = vadd.f32 %v97, %v938
    %v955 = vmax.f32 %v939, 0.0
    %v956 = vmax.f32 %v940, 0.0
    %v957 = vmax.f32 %v941, 0.0
    %v958 = vmax.f32 %v942, 0.0
    %v959 = vmax.f32 %v943, 0.0
    %v960 = vmax.f32 %v944, 0.0
    %v961 = vmax.f32 %v945, 0.0
    %v962 = vmax.f32 %v946, 0.0
    %v963 = vmax.f32 %v947, 0.0
    %v964 = vmax.f32 %v948, 0.0
    %v965 = vmax.f32 %v949, 0.0
    %v966 = vmax.f32 %v950, 0.0
    %v967 = vmax.f32 %v951, 0.0
    %v968 = vmax.f32 %v952, 0.0
    %v969 = vmax.f32 %v953, 0.0
    %v970 = vmax.f32 %v954, 0.0
    %971 = vst [vmem:[#allocation10] sm:$0xff] %v955
    %972 = vst [vmem:[#allocation10 + $0x8] sm:$0xff] %v956
    %973 = vst [vmem:[#allocation10 + $0x10] sm:$0xff] %v957
    %974 = vst [vmem:[#allocation10 + $0x18] sm:$0xff] %v958
    %975 = vst [vmem:[#allocation10 + $0x20] sm:$0xff] %v959
    %976 = vst [vmem:[#allocation10 + $0x28] sm:$0xff] %v960
    %977 = vst [vmem:[#allocation10 + $0x30] sm:$0xff] %v961
    %978 = vst [vmem:[#allocation10 + $0x38] sm:$0xff] %v962
    %979 = vst [vmem:[#allocation10 + $0x40] sm:$0xff] %v963
    %980 = vst [vmem:[#allocation10 + $0x48] sm:$0xff] %v964
    %981 = vst [vmem:[#allocation10 + $0x50] sm:$0xff] %v965
    %982 = vst [vmem:[#allocation10 + $0x58] sm:$0xff] %v966
    %983 = vst [vmem:[#allocation10 + $0x60] sm:$0xff] %v967
    %984 = vst [vmem:[#allocation10 + $0x68] sm:$0xff] %v968
    %985 = vst [vmem:[#allocation10 + $0x70] sm:$0xff] %v969
    %986 = vst [vmem:[#allocation10 + $0x78] sm:$0xff] %v970
    // Predicated region
    $region46: #{tpu_custom_call.1} parent=1 // pred_check
      _
    $region47: #{tpu_custom_call.1} parent=1 // pred_check_branch
      %988 = sbr.rel (0) target = $region49
    $region48: #{tpu_custom_call.1} parent=1 // pred_region
      %s990 = ssub.s32 2048, 2048
      %991 = vsyncadd [#allocation4], %s990
      %s992 = sshll.u32 [#allocation10], 4
      %s993 = int_to_ptr.vmem [resolvable:$true] %s992
      %998 = dma.vmem_to_hbm [thread:$0]  %s993, 2048, %s7, [#allocation4], 512, 512, 32
    $region49: #{tpu_custom_call.1} parent=1 // pred_fallthru
      _
    // Predicated region
    $region50: #{tpu_custom_call.1} parent=1 // pred_check
      _
    $region51: #{tpu_custom_call.1} parent=1 // pred_check_branch
      %1000 = sbr.rel (0) target = $region53
    $region52: #{tpu_custom_call.1} parent=1 // pred_region
      %1001 = dma.done [#allocation4], 2048
    $region53: #{tpu_custom_call.1} parent=1 // pred_fallthru
      _
    %1002 = vsyncpa [#allocation3], 1
    %1003 = vsyncpa [#allocation6], 1
    %1004 = vsyncpa [#allocation9], 1
    %1005 = vsyncpa [#allocation4], 1

</llo_original>
